<compile_context>
chip_gen: v7x
topology: tpu7x:2x2x1
jax: 0.10.0
libtpu: 0.0.40
codegen_flags: <defaults>
</compile_context>

<pallas_src>
import functools

import jax
import jax.numpy as jnp
from jax.experimental import pallas as pl
from jax.experimental.pallas import tpu as pltpu


def _proj_kernel(x_ref, w_ref, o_ref):
    # h_ext = X @ [W | W @ a_src | W @ a_dst]   (one MXU matmul, row-tiled)
    o_ref[...] = jnp.dot(
        x_ref[...].astype(jnp.float32),
        w_ref[...].astype(jnp.float32),
        preferred_element_type=jnp.float32,
    ).astype(o_ref.dtype)


def _attn_kernel(f_src_ref, f_dst_ref, adj_ref, h_ref, out_ref,
                 m_ref, l_ref, acc_ref, *, alpha, concat):
    ki = pl.program_id(1)

    @pl.when(ki == 0)
    def _():
        m_ref[...] = jnp.full_like(m_ref, -jnp.inf)
        l_ref[...] = jnp.zeros_like(l_ref)
        acc_ref[...] = jnp.zeros_like(acc_ref)

    # logits_ij = f_src_i + f_dst_j ;  s = -leakyrelu(logits)
    logits = f_src_ref[...] + f_dst_ref[...]                         # (tq, tk)
    s = -jnp.where(logits > 0.0, logits, alpha * logits)

    # Online row-max subtraction: exact (cancels in the final division), keeps
    # exp() in range even for strongly negative logits.
    m_new = jnp.maximum(m_ref[...], jnp.max(s, axis=-1, keepdims=True))
    scale = jnp.exp(m_ref[...] - m_new)                              # (tq, 1)
    p = jnp.exp(s - m_new) * adj_ref[...].astype(jnp.float32)        # masked exp

    l_ref[...] = scale * l_ref[...] + jnp.sum(p, axis=-1, keepdims=True)
    acc_ref[...] = scale * acc_ref[...] + jnp.dot(
        p.astype(jnp.bfloat16), h_ref[...].astype(jnp.bfloat16),
        preferred_element_type=jnp.float32)
    m_ref[...] = m_new

    @pl.when(ki == pl.num_programs(1) - 1)
    def _():
        hp = acc_ref[...] * pl.reciprocal(l_ref[...], approx=True)
        if concat:
            # ELU
            hp = jnp.where(hp > 0.0, hp, jnp.exp(jnp.minimum(hp, 0.0)) - 1.0)
        out_ref[...] = hp.astype(out_ref.dtype)


def sp_graph_attention_layer(x, adj, W, a, *, alpha=0.2, concat=True,
                             tq=128, tk=128, tm=128):
    """x: (N, Fin) f32; adj: (N, N) (nonzero => edge); W: (Fin, Fout); a: (1, 2*Fout)."""
    N, Fin = x.shape
    Fout = W.shape[1]

    tq, tk, tm = min(tq, N), min(tk, N), min(tm, N)
    assert N % tq == 0 and N % tk == 0 and N % tm == 0, "N must divide tile sizes"

    # Fold attention vectors into the projection: last two columns of h_ext are
    # f_src = h @ a_src and f_dst = h @ a_dst.
    a_src = a[0, :Fout].reshape(Fout, 1)
    a_dst = a[0, Fout:].reshape(Fout, 1)
    W_ext = jnp.concatenate([W, W @ a_src, W @ a_dst], axis=1).astype(jnp.float32)
    Fext = Fout + 2

    h_ext = pl.pallas_call(
        _proj_kernel,
        out_shape=jax.ShapeDtypeStruct((N, Fext), jnp.float32),
        grid_spec=pltpu.PrefetchScalarGridSpec(
            num_scalar_prefetch=0,
            grid=(N // tm,),
            in_specs=[pl.BlockSpec((tm, Fin), lambda i: (i, 0)),
                      pl.BlockSpec((Fin, Fext), lambda i: (0, 0))],
            out_specs=pl.BlockSpec((tm, Fext), lambda i: (i, 0)),
        ),
        compiler_params=pltpu.CompilerParams(dimension_semantics=("parallel",)),
    )(x.astype(jnp.float32), W_ext)

    h = h_ext[:, :Fout]                           # (N, Fout), resident K-side input
    f_src = h_ext[:, Fout:Fout + 1]               # (N, 1)  column (per q row)
    f_dst = h_ext[:, Fout + 1].reshape(1, N)      # (1, N)  lane-dense row (per kv col)

    adj_mask = (adj != 0).astype(jnp.int8)        # 4x less adj DMA than f32

    kernel = functools.partial(_attn_kernel, alpha=float(alpha), concat=bool(concat))

    return pl.pallas_call(
        kernel,
        out_shape=jax.ShapeDtypeStruct((N, Fout), jnp.float32),
        grid_spec=pltpu.PrefetchScalarGridSpec(
            num_scalar_prefetch=0,
            grid=(N // tq, N // tk),              # (row tiles, kv tiles); kv last
            in_specs=[
                pl.BlockSpec((tq, 1), lambda qi, ki: (qi, 0)),     # f_src
                pl.BlockSpec((1, tk), lambda qi, ki: (0, ki)),     # f_dst (row)
                pl.BlockSpec((tq, tk), lambda qi, ki: (qi, ki)),   # adj int8 mask
                pl.BlockSpec((tk, Fout), lambda qi, ki: (ki, 0)),  # h (kv rows)
            ],
            out_specs=pl.BlockSpec((tq, Fout), lambda qi, ki: (qi, 0)),
            scratch_shapes=[
                pltpu.VMEM((tq, 1), jnp.float32),     # running row max
                pltpu.VMEM((tq, 1), jnp.float32),     # running row sum (e_rowsum)
                pltpu.VMEM((tq, Fout), jnp.float32),  # running e @ h accumulator
            ],
        ),
        compiler_params=pltpu.CompilerParams(
            dimension_semantics=("parallel", "arbitrary")),
    )(f_src, f_dst, adj_mask, h)


def _reference(x, adj, W, a, alpha=0.2, concat=True):
    Fout = W.shape[1]
    h = x @ W
    logits = (h @ a[0, :Fout])[:, None] + (h @ a[0, Fout:])[None, :]
    lrelu = jnp.where(logits > 0, logits, alpha * logits)
    e = jnp.where(adj != 0, jnp.exp(-lrelu), 0.0)
    rowsum = e.sum(-1, keepdims=True)
    hp = (e @ h) / rowsum
    return jnp.where(hp > 0, hp, jnp.exp(hp) - 1.0) if concat else hp


if __name__ == "__main__":
    key = jax.random.PRNGKey(0)
    k_x, k_adj, k_w, k_a = jax.random.split(key, 4)

    N, Fin, Fout = 256, 16, 32
    alpha = 0.2

    x = jax.random.normal(k_x, (N, Fin), dtype=jnp.float32)

    # Random sparse adjacency with self-loops (so every row has >= 1 edge).
    adj = (jax.random.uniform(k_adj, (N, N)) < 0.10).astype(jnp.float32)
    adj = jnp.maximum(adj, jnp.eye(N, dtype=jnp.float32))

    # Xavier-uniform init (gain=1.414), matching nn.init.xavier_uniform_.
    gain = 1.414
    bw = gain * (6.0 / (Fin + Fout)) ** 0.5
    W = jax.random.uniform(k_w, (Fin, Fout), minval=-bw, maxval=bw, dtype=jnp.float32)
    ba = gain * (6.0 / (2 * Fout + 1)) ** 0.5
    a = jax.random.uniform(k_a, (1, 2 * Fout), minval=-ba, maxval=ba, dtype=jnp.float32)

    out = sp_graph_attention_layer(x, adj, W, a, alpha=alpha, concat=True)
    out = jax.block_until_ready(out)

    ref = _reference(x, adj, W, a, alpha=alpha, concat=True)
    assert out.shape == (N, Fout)
    assert bool(jnp.all(jnp.isfinite(out)))
    # bf16 aggregation matmul + approx reciprocal -> looser tolerance than pure f32.
    max_err = float(jnp.max(jnp.abs(out - ref)))
    assert bool(jnp.allclose(out, ref, atol=5e-2, rtol=5e-2)), max_err
    print("KERNEL_OK")
</pallas_src>

<mosaic_0001>
module attributes {stable_mosaic.version = 11 : i64} {
  func.func @_proj_kernel(%arg0: i32, %arg1: memref<128x16xf32, #tpu.memory_space<vmem>>, %arg2: memref<16x34xf32, #tpu.memory_space<vmem>>, %arg3: memref<128x34xf32, #tpu.memory_space<vmem>>) attributes {dimension_semantics = [#tpu.dimension_semantics<parallel>], iteration_bounds = array<i64: 2>, scalar_prefetch = 0 : i64, scratch_operands = 0 : i64, tpu.core_type = #tpu.core_type<tc>, window_params = [{transform_indices = @transform_0, window_bounds = array<i64: 128, 16>}, {pipeline_mode = #tpu.pipeline_mode<synchronous>, transform_indices = @transform_1, window_bounds = array<i64: 16, 34>}, {transform_indices = @transform_2, window_bounds = array<i64: 128, 34>}]} {
    %c0 = arith.constant 0 : index
    %c0_0 = arith.constant 0 : index
    %0 = vector.load %arg1[%c0, %c0_0] : memref<128x16xf32, #tpu.memory_space<vmem>>, vector<128x16xf32>
    %c0_1 = arith.constant 0 : index
    %c0_2 = arith.constant 0 : index
    %1 = vector.load %arg2[%c0_1, %c0_2] : memref<16x34xf32, #tpu.memory_space<vmem>>, vector<16x34xf32>
    %cst = arith.constant dense<0.000000e+00> : vector<128x34xf32>
    %2 = tpu.matmul %0, %1, %cst {dimension_numbers = #tpu.dot_dimension_numbers<[1], [0], [0], [1], [0, 0, 1, 1], [], []>} : vector<128x16xf32>, vector<16x34xf32>, vector<128x34xf32> -> vector<128x34xf32>
    %c0_3 = arith.constant 0 : index
    %c0_4 = arith.constant 0 : index
    %3 = vector.load %arg3[%c0_3, %c0_4] : memref<128x34xf32, #tpu.memory_space<vmem>>, vector<128x34xf32>
    tpu.vector_store %arg3[%c0_3, %c0_4], %2 {strides = array<i32>} : memref<128x34xf32, #tpu.memory_space<vmem>>, vector<128x34xf32>,
    return
  }
  func.func @transform_0(%arg0: i32) -> (i32, i32) {
    %c0_i32 = arith.constant 0 : i32
    %c0_i32_0 = arith.constant 0 : i32
    return %arg0, %c0_i32 : i32, i32
  }
  func.func @transform_1(%arg0: i32) -> (i32, i32) {
    %c0_i32 = arith.constant 0 : i32
    %c0_i32_0 = arith.constant 0 : i32
    %c0_i32_1 = arith.constant 0 : i32
    return %c0_i32, %c0_i32_0 : i32, i32
  }
  func.func @transform_2(%arg0: i32) -> (i32, i32) {
    %c0_i32 = arith.constant 0 : i32
    %c0_i32_0 = arith.constant 0 : i32
    return %arg0, %c0_i32 : i32, i32
  }
}

</mosaic_0001>

<llo_original>
// kernel: tpu_custom_call.1
$region0: #{tpu_custom_call.1}
  #allocation0 [shape = 'u32[]', space=smem, size = 0x4, offset = 0x4, fixed_abs, tag = 'smem constant byte address 0x4 - core index']
  #allocation1 [shape = 'u32[144,128]{1,0:T(1,128)}', space=vmem, size = 0x12000, scoped, tag = 'internal scratch']
  %s0 = inlined_call_operand.vmem [shape: f32[256,16], index: 0, kind: input, shape index: {}]
  %s1 = inlined_call_operand.vmem [shape: f32[16,34], index: 1, kind: input, shape index: {}]
  %s2 = inlined_call_operand.vmem [shape: f32[256,34], index: 2, kind: output, shape index: {}]
  %s3 = sld [smem:[#allocation0]]
  $region41: #{tpu_custom_call.1} parent=0
    _
  %s5 = ssub.s32 1, %s3
  %s6 = scalar_select 0, %s5, %s3
  loop: start=0, step=1, limit=4
  $region2: #{tpu_custom_call.1} parent=0 // loop_pre_header
    _
  $region3: #{tpu_custom_call.1} parent=0 // loop_header
    %s8 = sphi 0, %s12
    %p9 = scmp.ge.s32.totalorder %s8, 4
    %s18 = sphi 0, %s20
    %s21 = sphi 0, %s18
    %s22 = sphi 0, %s21
    %s38 = sphi 0, %s22
    %s42 = sphi 0, %s42
    %s44 = sphi 0, %s42
    %s45 = sphi 0, %s44
    %s59 = sphi 0, %s45
    %s65 = sphi 0, %s67
    %s68 = sphi 0, %s65
    %s69 = sphi 0, %s68
    %s85 = sphi 0, %s69
  $region4: #{tpu_custom_call.1} parent=0 // loop_header_branch
    %11 = sbr.rel (%p9) target = $region8
  $region5: #{tpu_custom_call.1} parent=0 // loop_body
    %s13 = ssub.s32 %s8, 1
    %s14 = ssub.s32 %s8, 2
    %s15 = sadd.s32 %s8, 1
    %s16 = ssub.s32 %s8, %s15
    %p17 = scmp.eq.s32.totalorder %s16, 0
    %s19 = sadd.s32 %s18, 1
    %s20 = scalar_select %p17, %s18, %s19
    %p23 = pneg %p17
    %p24 = scmp.eq.s32.totalorder %s8, 1
    %p25 = por %p23, %p24
    %p26 = scmp.ne.s32.totalorder %s18, %s21
    %p27 = scmp.eq.s32.totalorder %s8, 0
    %p28 = por %p26, %p27
    %p29 = scmp.ne.s32.totalorder %s18, %s21
    %p30 = scmp.eq.s32.totalorder %s13, 1
    %p31 = por %p29, %p30
    %p32 = scmp.ne.s32.totalorder %s21, %s22
    %p33 = scmp.eq.s32.totalorder %s13, 0
    %p34 = por %p32, %p33
    %p35 = scmp.ne.s32.totalorder %s21, %s22
    %p36 = scmp.eq.s32.totalorder %s14, 1
    %p37 = por %p35, %p36
    %p39 = scmp.ne.s32.totalorder %s22, %s38
    %p40 = scmp.eq.s32.totalorder %s14, 0
    %p41 = por %p39, %p40
    %s43 = sadd.s32 %s42, 1
    %p46 = scmp.eq.s32.totalorder %s8, 1
    %p47 = scmp.ne.s32.totalorder %s42, %s44
    %p48 = scmp.eq.s32.totalorder %s8, 0
    %p49 = por %p47, %p48
    %p50 = scmp.ne.s32.totalorder %s42, %s44
    %p51 = scmp.eq.s32.totalorder %s13, 1
    %p52 = por %p50, %p51
    %p53 = scmp.ne.s32.totalorder %s44, %s45
    %p54 = scmp.eq.s32.totalorder %s13, 0
    %p55 = por %p53, %p54
    %p56 = scmp.ne.s32.totalorder %s44, %s45
    %p57 = scmp.eq.s32.totalorder %s14, 1
    %p58 = por %p56, %p57
    %p60 = scmp.ne.s32.totalorder %s45, %s59
    %p61 = scmp.eq.s32.totalorder %s14, 0
    %p62 = por %p60, %p61
    %s63 = ssub.s32 %s8, %s15
    %p64 = scmp.eq.s32.totalorder %s63, 0
    %s66 = sadd.s32 %s65, 1
    %s67 = scalar_select %p64, %s65, %s66
    %p70 = pneg %p64
    %p71 = scmp.eq.s32.totalorder %s8, 1
    %p72 = por %p70, %p71
    %p73 = scmp.ne.s32.totalorder %s65, %s68
    %p74 = scmp.eq.s32.totalorder %s8, 0
    %p75 = por %p73, %p74
    %p76 = scmp.ne.s32.totalorder %s65, %s68
    %p77 = scmp.eq.s32.totalorder %s13, 1
    %p78 = por %p76, %p77
    %p79 = scmp.ne.s32.totalorder %s68, %s69
    %p80 = scmp.eq.s32.totalorder %s13, 0
    %p81 = por %p79, %p80
    %p82 = scmp.ne.s32.totalorder %s68, %s69
    %p83 = scmp.eq.s32.totalorder %s14, 1
    %p84 = por %p82, %p83
    %p86 = scmp.ne.s32.totalorder %s69, %s85
    %p87 = scmp.eq.s32.totalorder %s14, 0
    %p88 = por %p86, %p87
    %p89 = scmp.le.s32.totalorder 1, %s8
    %p90 = scmp.lt.s32.totalorder %s8, 3
    %p91 = pnand %p89, %p90
    %p92 = pneg %p91
    // Predicated region
    $region9: #{tpu_custom_call.1} parent=5 // pred_check
      _
    $region10: #{tpu_custom_call.1} parent=5 // pred_check_branch
      %94 = sbr.rel (%p91) target = $region12
    $region11: #{tpu_custom_call.1} parent=5 // pred_region
      %s95 = ssub.s32 %s8, 1
      // Predicated region
      $region13: #{tpu_custom_call.1} parent=11 // pred_check
        %p96 = pneg %p55
      $region14: #{tpu_custom_call.1} parent=11 // pred_check_branch
        %98 = sbr.rel (%p96) target = $region16
      $region15: #{tpu_custom_call.1} parent=11 // pred_region
        _
      $region16: #{tpu_custom_call.1} parent=11 // pred_fallthru
        _
    $region12: #{tpu_custom_call.1} parent=5 // pred_fallthru
      _
    %p99 = scmp.lt.s32.totalorder %s8, 2
    // Predicated region
    $region17: #{tpu_custom_call.1} parent=5 // pred_check
      %p100 = pneg %p99
    $region18: #{tpu_custom_call.1} parent=5 // pred_check_branch
      %102 = sbr.rel (%p100) target = $region20
    $region19: #{tpu_custom_call.1} parent=5 // pred_region
      // Predicated region
      $region21: #{tpu_custom_call.1} parent=19 // pred_check
        %p103 = pneg %p28
      $region22: #{tpu_custom_call.1} parent=19 // pred_check_branch
        %105 = sbr.rel (%p103) target = $region24
      $region23: #{tpu_custom_call.1} parent=19 // pred_region
        %s106 = smul.u32 16, %s8
        %p107 = scmp.lt.s32.totalorder %s106, 31
        %s108 = scalar_select %p107, %s106, 31
        %s109 = smul.addr %s108, 8
        %s110 = scalar_lea.vmem %s0, %s109
        %s111 = smul.u32 16, %s8
      $region24: #{tpu_custom_call.1} parent=19 // pred_fallthru
        _
    $region20: #{tpu_custom_call.1} parent=5 // pred_fallthru
      _
    %p112 = scmp.le.s32.totalorder 1, %s8
    %p113 = scmp.lt.s32.totalorder %s8, 3
    %p114 = pnand %p112, %p113
    %p115 = pneg %p114
    // Predicated region
    $region25: #{tpu_custom_call.1} parent=5 // pred_check
      _
    $region26: #{tpu_custom_call.1} parent=5 // pred_check_branch
      %117 = sbr.rel (%p114) target = $region28
    $region27: #{tpu_custom_call.1} parent=5 // pred_region
      %s118 = ssub.s32 %s8, 1
      %s119 = smul.u32 16, %s13
      %p120 = scmp.lt.s32.totalorder %s119, 31
      %s121 = scalar_select %p120, %s119, 31
      %s122 = smul.addr %s121, 8
      %s123 = scalar_lea.vmem %s0, %s122
      %p124 = pneg %p34
      %p125 = pneg %p31
      %p126 = pneg %p55
      %p127 = pneg %p52
      %p128 = pneg %p81
      %p129 = pneg %p78
      %s130 = smul.u32 16, %s13
      %p131 = scmp.lt.s32.totalorder %s130, 31
      %s132 = scalar_select %p131, %s130, 31
      %s133 = smul.addr %s132, 8
      %s134 = scalar_lea.vmem %s2, %s133
      %s135 = smul.u32 16, %s13
      %p136 = scmp.lt.s32.totalorder %s135, 31
      %s137 = scalar_select %p136, %s135, 31
      %s138 = smul.addr %s137, 8
      %s139 = scalar_lea.vmem %s0, %s138
      %s140 = smul.u32 16, %s13
      %s141 = smul.u32 16, %s13
      %p142 = scmp.lt.s32.totalorder %s141, 31
      %s143 = scalar_select %p142, %s141, 31
      %s144 = smul.addr %s143, 8
      %s145 = scalar_lea.vmem %s2, %s144
      %s146 = smul.u32 16, %s13
      %v147 = vld [vmem:[%s139] sm:$0xff]
      %v148 = vld [vmem:[%s139 + $0x8] sm:$0xff]
      %v149 = vld [vmem:[%s139 + $0x10] sm:$0xff]
      %v150 = vld [vmem:[%s139 + $0x18] sm:$0xff]
      %v151 = vld [vmem:[%s139 + $0x20] sm:$0xff]
      %v152 = vld [vmem:[%s139 + $0x28] sm:$0xff]
      %v153 = vld [vmem:[%s139 + $0x30] sm:$0xff]
      %v154 = vld [vmem:[%s139 + $0x38] sm:$0xff]
      %v155 = vld [vmem:[%s139 + $0x40] sm:$0xff]
      %v156 = vld [vmem:[%s139 + $0x48] sm:$0xff]
      %v157 = vld [vmem:[%s139 + $0x50] sm:$0xff]
      %v158 = vld [vmem:[%s139 + $0x58] sm:$0xff]
      %v159 = vld [vmem:[%s139 + $0x60] sm:$0xff]
      %v160 = vld [vmem:[%s139 + $0x68] sm:$0xff]
      %v161 = vld [vmem:[%s139 + $0x70] sm:$0xff]
      %v162 = vld [vmem:[%s139 + $0x78] sm:$0xff]
      %v163 = vld [vmem:[%s1] sm:$0xff]
      %v164 = vld [vmem:[%s1 + $0x8] sm:$0xff]
      %vm165 = vcmask 130048
      %v167 = vsel %vm165, %v147, 0
      %v170 = vsel %vm165, %v148, 0
      %v173 = vsel %vm165, %v149, 0
      %v176 = vsel %vm165, %v150, 0
      %v179 = vsel %vm165, %v151, 0
      %v182 = vsel %vm165, %v152, 0
      %v185 = vsel %vm165, %v153, 0
      %v188 = vsel %vm165, %v154, 0
      %v191 = vsel %vm165, %v155, 0
      %v194 = vsel %vm165, %v156, 0
      %v197 = vsel %vm165, %v157, 0
      %v200 = vsel %vm165, %v158, 0
      %v203 = vsel %vm165, %v159, 0
      %v206 = vsel %vm165, %v160, 0
      %v209 = vsel %vm165, %v161, 0
      %v212 = vsel %vm165, %v162, 0
      %214 = vmatprep.subr.mxu0 0.0
      %215 = vmatpush1.msra.mxu0 %v163
      %216 = vmatprep.subr.mxu0 0.0
      %217 = vmatpush1.msra.mxu0 %v164
      %218 = vmatprep.subr.mxu0 0.0
      %219 = vmatpush1.msra.mxu0 0.0
      %220 = vmatprep.subr.mxu0 0.0
      %221 = vmatpush1.msra.mxu0 0.0
      %222 = vmatprep.subr.mxu0 0.0
      %223 = vmatpush1.msra.mxu0 0.0
      %224 = vmatprep.subr.mxu0 0.0
      %225 = vmatpush1.msra.mxu0 0.0
      %226 = vmatprep.subr.mxu0 0.0
      %227 = vmatpush1.msra.mxu0 0.0
      %228 = vmatprep.subr.mxu0 0.0
      %229 = vmatpush1.msra.mxu0 0.0
      %230 = vmatprep.subr.mxu0 0.0
      %231 = vmatpush1.msra.mxu0 0.0
      %232 = vmatprep.subr.mxu0 0.0
      %233 = vmatpush1.msra.mxu0 0.0
      %234 = vmatprep.subr.mxu0 0.0
      %235 = vmatpush1.msra.mxu0 0.0
      %236 = vmatprep.subr.mxu0 0.0
      %237 = vmatpush1.msra.mxu0 0.0
      %238 = vmatprep.subr.mxu0 0.0
      %239 = vmatpush1.msra.mxu0 0.0
      %240 = vmatprep.subr.mxu0 0.0
      %241 = vmatpush1.msra.mxu0 0.0
      %242 = vmatprep.subr.mxu0 0.0
      %243 = vmatpush1.msra.mxu0 0.0
      %244 = vmatprep.subr.mxu0 0.0
      %245 = vmatpush1.msra.mxu0 0.0
      %246 = vmatprep.subr.mxu0 0.0
      %247 = vmatpush1.msra.mxu0 0.0
      %248 = vmatprep.subr.mxu0 0.0
      %249 = vmatpush1.msra.mxu0 0.0
      %250 = vmatprep.subr.mxu0 0.0
      %251 = vmatpush1.msra.mxu0 0.0
      %252 = vmatprep.subr.mxu0 0.0
      %253 = vmatpush1.msra.mxu0 0.0
      %254 = vmatprep.subr.mxu0 0.0
      %255 = vmatpush1.msra.mxu0 0.0
      %256 = vmatprep.subr.mxu0 0.0
      %257 = vmatpush1.msra.mxu0 0.0
      %258 = vmatprep.subr.mxu0 0.0
      %259 = vmatpush1.msra.mxu0 0.0
      %260 = vmatprep.subr.mxu0 0.0
      %261 = vmatpush1.msra.mxu0 0.0
      %262 = vmatprep.subr.mxu0 0.0
      %263 = vmatpush1.msra.mxu0 0.0
      %264 = vmatprep.subr.mxu0 0.0
      %265 = vmatpush1.msra.mxu0 0.0
      %266 = vmatprep.subr.mxu0 0.0
      %267 = vmatpush1.msra.mxu0 0.0
      %268 = vmatprep.subr.mxu0 0.0
      %269 = vmatpush1.msra.mxu0 0.0
      %270 = vmatprep.subr.mxu0 0.0
      %271 = vmatpush1.msra.mxu0 0.0
      %272 = vmatprep.subr.mxu0 0.0
      %273 = vmatpush1.msra.mxu0 0.0
      %274 = vmatprep.subr.mxu0 0.0
      %275 = vmatpush1.msra.mxu0 0.0
      %276 = vmatprep.subr.mxu0 0.0
      %277 = vmatpush1.msra.mxu0 0.0
      %278 = vmatprep.mubr.f32.mxu0 0.0
      %279 = vmatmul.mubr.f32.gmra.mrb[0].mxu0 %v167
      %v280 = vpop.f32.mrb[0].mxu0
      %v281 = vadd.f32 0.0, %v280
      %v282 = vpop.f32.mrb[0].mxu0
      %283 = vmatprep.mubr.f32.mxu0 0.0
      %284 = vmatmul.mubr.f32.gmra.mrb[0].mxu0 %v170
      %v285 = vpop.f32.mrb[0].mxu0
      %v286 = vadd.f32 0.0, %v285
      %v287 = vpop.f32.mrb[0].mxu0
      %288 = vmatprep.mubr.f32.mxu0 0.0
      %289 = vmatmul.mubr.f32.gmra.mrb[0].mxu0 %v173
      %v290 = vpop.f32.mrb[0].mxu0
      %v291 = vadd.f32 0.0, %v290
      %v292 = vpop.f32.mrb[0].mxu0
      %293 = vmatprep.mubr.f32.mxu0 0.0
      %294 = vmatmul.mubr.f32.gmra.mrb[0].mxu0 %v176
      %v295 = vpop.f32.mrb[0].mxu0
      %v296 = vadd.f32 0.0, %v295
      %v297 = vpop.f32.mrb[0].mxu0
      %298 = vmatprep.mubr.f32.mxu0 0.0
      %299 = vmatmul.mubr.f32.gmra.mrb[0].mxu0 %v179
      %v300 = vpop.f32.mrb[0].mxu0
      %v301 = vadd.f32 0.0, %v300
      %v302 = vpop.f32.mrb[0].mxu0
      %303 = vmatprep.mubr.f32.mxu0 0.0
      %304 = vmatmul.mubr.f32.gmra.mrb[0].mxu0 %v182
      %v305 = vpop.f32.mrb[0].mxu0
      %v306 = vadd.f32 0.0, %v305
      %v307 = vpop.f32.mrb[0].mxu0
      %308 = vmatprep.mubr.f32.mxu0 0.0
      %309 = vmatmul.mubr.f32.gmra.mrb[0].mxu0 %v185
      %v310 = vpop.f32.mrb[0].mxu0
      %v311 = vadd.f32 0.0, %v310
      %v312 = vpop.f32.mrb[0].mxu0
      %313 = vmatprep.mubr.f32.mxu0 0.0
      %314 = vmatmul.mubr.f32.gmra.mrb[0].mxu0 %v188
      %v315 = vpop.f32.mrb[0].mxu0
      %v316 = vadd.f32 0.0, %v315
      %v317 = vpop.f32.mrb[0].mxu0
      %318 = vmatprep.mubr.f32.mxu0 0.0
      %319 = vmatmul.mubr.f32.gmra.mrb[0].mxu0 %v191
      %v320 = vpop.f32.mrb[0].mxu0
      %v321 = vadd.f32 0.0, %v320
      %v322 = vpop.f32.mrb[0].mxu0
      %323 = vmatprep.mubr.f32.mxu0 0.0
      %324 = vmatmul.mubr.f32.gmra.mrb[0].mxu0 %v194
      %v325 = vpop.f32.mrb[0].mxu0
      %v326 = vadd.f32 0.0, %v325
      %v327 = vpop.f32.mrb[0].mxu0
      %328 = vmatprep.mubr.f32.mxu0 0.0
      %329 = vmatmul.mubr.f32.gmra.mrb[0].mxu0 %v197
      %v330 = vpop.f32.mrb[0].mxu0
      %v331 = vadd.f32 0.0, %v330
      %v332 = vpop.f32.mrb[0].mxu0
      %333 = vmatprep.mubr.f32.mxu0 0.0
      %334 = vmatmul.mubr.f32.gmra.mrb[0].mxu0 %v200
      %v335 = vpop.f32.mrb[0].mxu0
      %v336 = vadd.f32 0.0, %v335
      %v337 = vpop.f32.mrb[0].mxu0
      %338 = vmatprep.mubr.f32.mxu0 0.0
      %339 = vmatmul.mubr.f32.gmra.mrb[0].mxu0 %v203
      %v340 = vpop.f32.mrb[0].mxu0
      %v341 = vadd.f32 0.0, %v340
      %v342 = vpop.f32.mrb[0].mxu0
      %343 = vmatprep.mubr.f32.mxu0 0.0
      %344 = vmatmul.mubr.f32.gmra.mrb[0].mxu0 %v206
      %v345 = vpop.f32.mrb[0].mxu0
      %v346 = vadd.f32 0.0, %v345
      %v347 = vpop.f32.mrb[0].mxu0
      %348 = vmatprep.mubr.f32.mxu0 0.0
      %349 = vmatmul.mubr.f32.gmra.mrb[0].mxu0 %v209
      %v350 = vpop.f32.mrb[0].mxu0
      %v351 = vadd.f32 0.0, %v350
      %v352 = vpop.f32.mrb[0].mxu0
      %353 = vmatprep.mubr.f32.mxu0 0.0
      %354 = vmatmul.mubr.f32.gmra.mrb[0].mxu0 %v212
      %v355 = vpop.f32.mrb[0].mxu0
      %v356 = vadd.f32 0.0, %v355
      %v357 = vpop.f32.mrb[0].mxu0
      %358 = vdwg.mxu0
      %vm359 = vcmask 277504
      %360 = vst.msk [vmem:[%s145] sm:$0xff] %vm359, %v281
      %361 = vst.msk [vmem:[%s145 + $0x8] sm:$0xff] %vm359, %v286
      %362 = vst.msk [vmem:[%s145 + $0x10] sm:$0xff] %vm359, %v291
      %363 = vst.msk [vmem:[%s145 + $0x18] sm:$0xff] %vm359, %v296
      %364 = vst.msk [vmem:[%s145 + $0x20] sm:$0xff] %vm359, %v301
      %365 = vst.msk [vmem:[%s145 + $0x28] sm:$0xff] %vm359, %v306
      %366 = vst.msk [vmem:[%s145 + $0x30] sm:$0xff] %vm359, %v311
      %367 = vst.msk [vmem:[%s145 + $0x38] sm:$0xff] %vm359, %v316
      %368 = vst.msk [vmem:[%s145 + $0x40] sm:$0xff] %vm359, %v321
      %369 = vst.msk [vmem:[%s145 + $0x48] sm:$0xff] %vm359, %v326
      %370 = vst.msk [vmem:[%s145 + $0x50] sm:$0xff] %vm359, %v331
      %371 = vst.msk [vmem:[%s145 + $0x58] sm:$0xff] %vm359, %v336
      %372 = vst.msk [vmem:[%s145 + $0x60] sm:$0xff] %vm359, %v341
      %373 = vst.msk [vmem:[%s145 + $0x68] sm:$0xff] %vm359, %v346
      %374 = vst.msk [vmem:[%s145 + $0x70] sm:$0xff] %vm359, %v351
      %375 = vst.msk [vmem:[%s145 + $0x78] sm:$0xff] %vm359, %v356
      %s376 = smul.u32 16, %s13
      %p377 = scmp.lt.s32.totalorder %s376, 31
      %s378 = scalar_select %p377, %s376, 31
      %s379 = smul.addr %s378, 8
      %s380 = scalar_lea.vmem %s2, %s379
      // Predicated region
      $region29: #{tpu_custom_call.1} parent=27 // pred_check
        %p381 = pneg %p78
      $region30: #{tpu_custom_call.1} parent=27 // pred_check_branch
        %383 = sbr.rel (%p381) target = $region32
      $region31: #{tpu_custom_call.1} parent=27 // pred_region
        %s384 = smul.u32 16, %s13
      $region32: #{tpu_custom_call.1} parent=27 // pred_fallthru
        _
    $region28: #{tpu_custom_call.1} parent=5 // pred_fallthru
      _
    %p385 = scmp.le.s32.totalorder 2, %s8
    // Predicated region
    $region33: #{tpu_custom_call.1} parent=5 // pred_check
      %p386 = pneg %p385
    $region34: #{tpu_custom_call.1} parent=5 // pred_check_branch
      %388 = sbr.rel (%p386) target = $region36
    $region35: #{tpu_custom_call.1} parent=5 // pred_region
      %s389 = ssub.s32 %s8, 2
      // Predicated region
      $region37: #{tpu_custom_call.1} parent=35 // pred_check
        %p390 = pneg %p84
      $region38: #{tpu_custom_call.1} parent=35 // pred_check_branch
        %392 = sbr.rel (%p390) target = $region40
      $region39: #{tpu_custom_call.1} parent=35 // pred_region
        %s393 = smul.u32 16, %s14
        %p394 = scmp.lt.s32.totalorder %s393, 31
        %s395 = scalar_select %p394, %s393, 31
        %s396 = smul.addr %s395, 8
        %s397 = scalar_lea.vmem %s2, %s396
      $region40: #{tpu_custom_call.1} parent=35 // pred_fallthru
        _
    $region36: #{tpu_custom_call.1} parent=5 // pred_fallthru
      _
  $region6: #{tpu_custom_call.1} parent=0 // loop_footer
    %s12 = sadd.s32 1, %s8
  $region7: #{tpu_custom_call.1} parent=0 // loop_footer_branch
    %7 = sbr.rel target = $region3
  $region8: #{tpu_custom_call.1} parent=0 // loop_exit
    _

</llo_original>
